<compile_context>
chip_gen: v6e
topology: v6e:2x2x1
jax: 0.10.0
libtpu: 0.0.40
codegen_flags: <defaults>
</compile_context>

<pallas_src>
import jax
import jax.numpy as jnp
from jax.experimental import pallas as pl
from jax.experimental.pallas import tpu as pltpu


def mlp_kernel(x_ref, w1_ref, b1_ref, w2_ref, b2_ref, o_ref):
    # x: (TB, F) bf16 ; w1: (F, H) bf16 ; b1: (1, H) f32
    # w2: (H, Ap) f32 ; b2: (1, Ap) f32 ; o: (TB, Ap) f32
    h = jnp.dot(x_ref[...], w1_ref[...],
                preferred_element_type=jnp.float32)           # MXU, f32 accumulate
    h = jnp.tanh(h + b1_ref[...])                             # f32 bias + tanh (EUP)
    q = jnp.dot(h.astype(w2_ref.dtype), w2_ref[...],
                preferred_element_type=jnp.float32)           # tiny f32 matmul
    o_ref[...] = (q + b2_ref[...]).astype(o_ref.dtype)        # lane-dense store


def _round_up(n, m):
    return ((n + m - 1) // m) * m


def _vmem_capacity_bytes():
    try:
        return int(pltpu.get_tpu_info().vmem_capacity_bytes)
    except Exception:
        return 64 << 20  # conservative default (v7x per-TensorCore VMEM)


def _choose_block_b(B, F, Ap, x_itemsize, vmem_cap):
    """Pick the batch tile. Single step for small B; generation-aware cap otherwise."""
    # Per-row VMEM cost: double-buffered x tile + double-buffered f32 out tile.
    row_bytes = 2 * x_itemsize * F + 2 * 4 * Ap
    budget = vmem_cap // 2                       # leave the rest for weights/scratch
    max_rows = max(8, (budget // row_bytes) // 8 * 8)
    # 512-row tiles on 128 MiB-VMEM parts (v5e/v6e), 256 on 64 MiB parts (v7x).
    cap = 512 if vmem_cap > (96 << 20) else 256
    cap = min(cap, max_rows)
    if B <= cap:
        # Dual-TensorCore parts (64 MiB VMEM): split mid-sized batches into two
        # grid steps so the "parallel" batch axis shards across both cores.
        if vmem_cap <= (96 << 20) and B > 128:
            half = -(-B // 2)
            return min(cap, _round_up(half, 8))
        return max(B, 1)                          # single grid step, block == full B
    return cap


def prepare_params(w1, b1, w2, b2, *, compute_dtype=jnp.bfloat16):
    """One-time (per parameter-update) packing of params. NOT on the hot path.

    w1: (F, H), b1: (H,) or (1, H), w2: (H, A), b2: (A,) or (1, A).
    w1 is cast to the compute dtype with NO lane padding; w2/b2 are zero-padded
    along the action dim to a 128-lane multiple (lane-dense output store) and
    kept in f32 (they are tiny).
    """
    F, H = w1.shape
    A = w2.shape[1]
    Ap = _round_up(A, 128)
    w1p = jnp.asarray(w1).astype(compute_dtype)
    b1p = jnp.asarray(b1, jnp.float32).reshape(1, H)
    w2p = jnp.zeros((H, Ap), jnp.float32).at[:, :A].set(jnp.asarray(w2, jnp.float32))
    b2p = jnp.zeros((1, Ap), jnp.float32).at[:, :A].set(
        jnp.asarray(b2, jnp.float32).reshape(1, A))
    return w1p, b1p, w2p, b2p


def network_forward(x, w1p, b1p, w2p, b2p, *, n_actions=None, block_b=None):
    """Fused Linear(F->H) -> Tanh -> Linear(H->A). x: (B, F) f32. Returns (B, A) f32."""
    B, F = x.shape
    H = w1p.shape[1]
    Ap = w2p.shape[1]
    A = Ap if n_actions is None else n_actions
    x_dtype = w1p.dtype
    x_itemsize = jnp.dtype(x_dtype).itemsize

    vmem_cap = _vmem_capacity_bytes()
    if block_b is None:
        block_b = _choose_block_b(B, F, Ap, x_itemsize, vmem_cap)

    if B % block_b == 0:
        Bp = B
        xp = x.astype(x_dtype)                    # no padded copy, single cheap cast
    else:
        Bp = _round_up(B, block_b)
        xp = jnp.zeros((Bp, F), x_dtype).at[:B, :].set(x.astype(x_dtype))

    grid = (Bp // block_b,)

    # VMEM budget: double-buffered x/out tiles + (conservatively double-buffered)
    # resident weights, with 1.5x headroom, clamped to physical VMEM capacity.
    wbytes = F * H * x_itemsize + 4 * H + 4 * H * Ap + 4 * Ap
    est = 2 * block_b * F * x_itemsize * 2 + 2 * wbytes + 2 * block_b * Ap * 4
    vmem_limit = max(32 << 20, int(est * 1.5))
    vmem_limit = int(min(vmem_limit, vmem_cap - (4 << 20)))

    def build(single_buffer_weights):
        if single_buffer_weights:
            def wspec(shape):
                # Fetched once (constant index_map); single buffer halves VMEM use.
                return pl.BlockSpec(shape, lambda i: (0, 0),
                                    pipeline_mode=pl.Buffered(1))
        else:
            def wspec(shape):
                return pl.BlockSpec(shape, lambda i: (0, 0))
        return pl.pallas_call(
            mlp_kernel,
            out_shape=jax.ShapeDtypeStruct((Bp, Ap), jnp.float32),
            grid=grid,
            in_specs=[
                # x: tiled over the batch axis, double-buffered against compute.
                pl.BlockSpec((block_b, F), lambda i: (i, 0)),
                # Weights/biases: constant block index -> VMEM-resident across grid.
                wspec((F, H)),
                wspec((1, H)),
                wspec((H, Ap)),
                wspec((1, Ap)),
            ],
            out_specs=pl.BlockSpec((block_b, Ap), lambda i: (i, 0)),
            compiler_params=pltpu.CompilerParams(
                dimension_semantics=("parallel",),       # independent batch tiles
                vmem_limit_bytes=vmem_limit),
        )

    try:
        out = build(True)(xp, w1p, b1p, w2p, b2p)
    except Exception:
        # Fallback for jax versions without pipeline_mode=pl.Buffered support on
        # the resident-weight specs; they get the default double buffering.
        out = build(False)(xp, w1p, b1p, w2p, b2p)

    # Slice away batch padding and the zero-padded action columns.
    return out[:B, :A]


def init_params(key, in_features, hidden, n_actions):
    """Deterministic init mimicking torch.nn.Linear (uniform +/- 1/sqrt(fan_in))."""
    k1, k2, k3, k4 = jax.random.split(key, 4)
    lim1 = 1.0 / jnp.sqrt(jnp.float32(in_features))
    lim2 = 1.0 / jnp.sqrt(jnp.float32(hidden))
    w1 = jax.random.uniform(k1, (in_features, hidden), jnp.float32, -lim1, lim1)
    b1 = jax.random.uniform(k2, (1, hidden), jnp.float32, -lim1, lim1)
    w2 = jax.random.uniform(k3, (hidden, n_actions), jnp.float32, -lim2, lim2)
    b2 = jax.random.uniform(k4, (1, n_actions), jnp.float32, -lim2, lim2)
    return w1, b1, w2, b2


if __name__ == "__main__":
    # Small synthetic shapes consistent with the module:
    #   F = prod(observation_space.shape) (small synthetic stand-in), H = 64
    #   (fixed by the module), A = 6 (SpaceInvaders action space).
    B = 16         # replay-minibatch / vectorized-env inference batch
    F = 256        # in_features
    H = 64         # hidden width, fixed by the module
    A = 6          # env.action_space.n

    key = jax.random.PRNGKey(0)
    kx, kp = jax.random.split(key)
    x = jax.random.normal(kx, (B, F), jnp.float32)
    w1, b1, w2, b2 = init_params(kp, F, H, A)

    # Hoisted per-parameter-update pad/cast (NOT on the per-forward hot path).
    w1p, b1p, w2p, b2p = prepare_params(w1, b1, w2, b2)

    # Reference in plain JAX f32 (same math as the torch forward).
    ref = jnp.tanh(x @ w1 + b1) @ w2 + b2

    # Default path: single grid step (block_b == B), no batch padding.
    q = jax.block_until_ready(network_forward(x, w1p, b1p, w2p, b2p, n_actions=A))
    assert q.shape == (B, A)
    assert jnp.allclose(q, ref, atol=5e-2, rtol=5e-2), "mismatch vs reference (1-step)"

    # Tiled path: multi-step grid over the batch (exercises the pipelined path).
    q2 = jax.block_until_ready(
        network_forward(x, w1p, b1p, w2p, b2p, n_actions=A, block_b=8))
    assert jnp.allclose(q2, ref, atol=5e-2, rtol=5e-2), "mismatch vs reference (tiled)"

    # `act()` equivalent: argmax over Q-values for a single observation.
    # TODO(synk): gym env stepping / replay buffer are host-side RL plumbing, not kernels.
    q_act = network_forward(x[:1], w1p, b1p, w2p, b2p, n_actions=A)
    action = int(jnp.argmax(q_act, axis=1)[0])
    assert 0 <= action < A

    print("KERNEL_OK")
</pallas_src>

<mosaic_0001>
module attributes {stable_mosaic.version = 11 : i64} {
  func.func @mlp_kernel(%arg0: i32, %arg1: memref<16x256xbf16, #tpu.memory_space<vmem>>, %arg2: memref<256x64xbf16, #tpu.memory_space<vmem>>, %arg3: memref<1x64xf32, #tpu.memory_space<vmem>>, %arg4: memref<64x128xf32, #tpu.memory_space<vmem>>, %arg5: memref<1x128xf32, #tpu.memory_space<vmem>>, %arg6: memref<16x128xf32, #tpu.memory_space<vmem>>) attributes {dimension_semantics = [#tpu.dimension_semantics<parallel>], iteration_bounds = array<i64: 1>, scalar_prefetch = 0 : i64, scratch_operands = 0 : i64, tpu.core_type = #tpu.core_type<tc>, window_params = [{transform_indices = @transform_0, window_bounds = array<i64: 16, 256>}, {pipeline_mode = #tpu.pipeline_mode<synchronous>, transform_indices = @transform_1, window_bounds = array<i64: 256, 64>}, {pipeline_mode = #tpu.pipeline_mode<synchronous>, transform_indices = @transform_2, window_bounds = array<i64: 1, 64>}, {pipeline_mode = #tpu.pipeline_mode<synchronous>, transform_indices = @transform_3, window_bounds = array<i64: 64, 128>}, {pipeline_mode = #tpu.pipeline_mode<synchronous>, transform_indices = @transform_4, window_bounds = array<i64: 1, 128>}, {transform_indices = @transform_5, window_bounds = array<i64: 16, 128>}]} {
    %c0 = arith.constant 0 : index
    %c0_0 = arith.constant 0 : index
    %0 = vector.load %arg1[%c0, %c0_0] : memref<16x256xbf16, #tpu.memory_space<vmem>>, vector<16x256xbf16>
    %c0_1 = arith.constant 0 : index
    %c0_2 = arith.constant 0 : index
    %1 = vector.load %arg2[%c0_1, %c0_2] : memref<256x64xbf16, #tpu.memory_space<vmem>>, vector<256x64xbf16>
    %cst = arith.constant dense<0.000000e+00> : vector<16x64xf32>
    %2 = tpu.matmul %0, %1, %cst {dimension_numbers = #tpu.dot_dimension_numbers<[1], [0], [0], [1], [0, 0, 1, 1], [], []>} : vector<16x256xbf16>, vector<256x64xbf16>, vector<16x64xf32> -> vector<16x64xf32>
    %c0_3 = arith.constant 0 : index
    %c0_4 = arith.constant 0 : index
    %3 = vector.load %arg3[%c0_3, %c0_4] : memref<1x64xf32, #tpu.memory_space<vmem>>, vector<1x64xf32>
    %4 = vector.broadcast %3 : vector<1x64xf32> to vector<16x64xf32>
    %5 = arith.addf %2, %4 : vector<16x64xf32>
    %6 = math.tanh %5 : vector<16x64xf32>
    %c0_5 = arith.constant 0 : index
    %c0_6 = arith.constant 0 : index
    %7 = vector.load %arg4[%c0_5, %c0_6] : memref<64x128xf32, #tpu.memory_space<vmem>>, vector<64x128xf32>
    %cst_7 = arith.constant dense<0.000000e+00> : vector<16x128xf32>
    %8 = tpu.matmul %6, %7, %cst_7 {dimension_numbers = #tpu.dot_dimension_numbers<[1], [0], [0], [1], [0, 0, 1, 1], [], []>} : vector<16x64xf32>, vector<64x128xf32>, vector<16x128xf32> -> vector<16x128xf32>
    %c0_8 = arith.constant 0 : index
    %c0_9 = arith.constant 0 : index
    %9 = vector.load %arg5[%c0_8, %c0_9] : memref<1x128xf32, #tpu.memory_space<vmem>>, vector<1x128xf32>
    %10 = vector.broadcast %9 : vector<1x128xf32> to vector<16x128xf32>
    %11 = arith.addf %8, %10 : vector<16x128xf32>
    %c0_10 = arith.constant 0 : index
    %c0_11 = arith.constant 0 : index
    %12 = vector.load %arg6[%c0_10, %c0_11] : memref<16x128xf32, #tpu.memory_space<vmem>>, vector<16x128xf32>
    tpu.vector_store %arg6[%c0_10, %c0_11], %11 {strides = array<i32>} : memref<16x128xf32, #tpu.memory_space<vmem>>, vector<16x128xf32>,
    return
  }
  func.func @transform_0(%arg0: i32) -> (i32, i32) {
    %c0_i32 = arith.constant 0 : i32
    %c0_i32_0 = arith.constant 0 : i32
    return %arg0, %c0_i32 : i32, i32
  }
  func.func @transform_1(%arg0: i32) -> (i32, i32) {
    %c0_i32 = arith.constant 0 : i32
    %c0_i32_0 = arith.constant 0 : i32
    %c0_i32_1 = arith.constant 0 : i32
    return %c0_i32, %c0_i32_0 : i32, i32
  }
  func.func @transform_2(%arg0: i32) -> (i32, i32) {
    %c0_i32 = arith.constant 0 : i32
    %c0_i32_0 = arith.constant 0 : i32
    %c0_i32_1 = arith.constant 0 : i32
    return %c0_i32, %c0_i32_0 : i32, i32
  }
  func.func @transform_3(%arg0: i32) -> (i32, i32) {
    %c0_i32 = arith.constant 0 : i32
    %c0_i32_0 = arith.constant 0 : i32
    %c0_i32_1 = arith.constant 0 : i32
    return %c0_i32, %c0_i32_0 : i32, i32
  }
  func.func @transform_4(%arg0: i32) -> (i32, i32) {
    %c0_i32 = arith.constant 0 : i32
    %c0_i32_0 = arith.constant 0 : i32
    %c0_i32_1 = arith.constant 0 : i32
    return %c0_i32, %c0_i32_0 : i32, i32
  }
  func.func @transform_5(%arg0: i32) -> (i32, i32) {
    %c0_i32 = arith.constant 0 : i32
    %c0_i32_0 = arith.constant 0 : i32
    return %arg0, %c0_i32 : i32, i32
  }
}

module attributes {stable_mosaic.version = 11 : i64} {
  func.func @mlp_kernel(%arg0: i32, %arg1: memref<16x256xbf16, #tpu.memory_space<vmem>>, %arg2: memref<256x64xbf16, #tpu.memory_space<vmem>>, %arg3: memref<1x64xf32, #tpu.memory_space<vmem>>, %arg4: memref<64x128xf32, #tpu.memory_space<vmem>>, %arg5: memref<1x128xf32, #tpu.memory_space<vmem>>, %arg6: memref<16x128xf32, #tpu.memory_space<vmem>>) attributes {dimension_semantics = [#tpu.dimension_semantics<parallel>], iteration_bounds = array<i64: 1>, scalar_prefetch = 0 : i64, scratch_operands = 0 : i64, tpu.core_type = #tpu.core_type<tc>, window_params = [{transform_indices = @transform_0, window_bounds = array<i64: 16, 256>}, {pipeline_mode = #tpu.pipeline_mode<synchronous>, transform_indices = @transform_1, window_bounds = array<i64: 256, 64>}, {pipeline_mode = #tpu.pipeline_mode<synchronous>, transform_indices = @transform_2, window_bounds = array<i64: 1, 64>}, {pipeline_mode = #tpu.pipeline_mode<synchronous>, transform_indices = @transform_3, window_bounds = array<i64: 64, 128>}, {pipeline_mode = #tpu.pipeline_mode<synchronous>, transform_indices = @transform_4, window_bounds = array<i64: 1, 128>}, {transform_indices = @transform_5, window_bounds = array<i64: 16, 128>}]} {
    %c0 = arith.constant 0 : index
    %c0_0 = arith.constant 0 : index
    %0 = vector.load %arg1[%c0, %c0_0] : memref<16x256xbf16, #tpu.memory_space<vmem>>, vector<16x256xbf16>
    %c0_1 = arith.constant 0 : index
    %c0_2 = arith.constant 0 : index
    %1 = vector.load %arg2[%c0_1, %c0_2] : memref<256x64xbf16, #tpu.memory_space<vmem>>, vector<256x64xbf16>
    %cst = arith.constant dense<0.000000e+00> : vector<16x64xf32>
    %2 = tpu.matmul %0, %1, %cst {dimension_numbers = #tpu.dot_dimension_numbers<[1], [0], [0], [1], [0, 0, 1, 1], [], []>} : vector<16x256xbf16>, vector<256x64xbf16>, vector<16x64xf32> -> vector<16x64xf32>
    %c0_3 = arith.constant 0 : index
    %c0_4 = arith.constant 0 : index
    %3 = vector.load %arg3[%c0_3, %c0_4] : memref<1x64xf32, #tpu.memory_space<vmem>>, vector<1x64xf32>
    %4 = vector.broadcast %3 : vector<1x64xf32> to vector<16x64xf32>
    %5 = arith.addf %2, %4 : vector<16x64xf32>
    %6 = math.tanh %5 : vector<16x64xf32>
    %c0_5 = arith.constant 0 : index
    %c0_6 = arith.constant 0 : index
    %7 = vector.load %arg4[%c0_5, %c0_6] : memref<64x128xf32, #tpu.memory_space<vmem>>, vector<64x128xf32>
    %cst_7 = arith.constant dense<0.000000e+00> : vector<16x128xf32>
    %8 = tpu.matmul %6, %7, %cst_7 {dimension_numbers = #tpu.dot_dimension_numbers<[1], [0], [0], [1], [0, 0, 1, 1], [], []>} : vector<16x64xf32>, vector<64x128xf32>, vector<16x128xf32> -> vector<16x128xf32>
    %c0_8 = arith.constant 0 : index
    %c0_9 = arith.constant 0 : index
    %9 = vector.load %arg5[%c0_8, %c0_9] : memref<1x128xf32, #tpu.memory_space<vmem>>, vector<1x128xf32>
    %10 = vector.broadcast %9 : vector<1x128xf32> to vector<16x128xf32>
    %11 = arith.addf %8, %10 : vector<16x128xf32>
    %c0_10 = arith.constant 0 : index
    %c0_11 = arith.constant 0 : index
    %12 = vector.load %arg6[%c0_10, %c0_11] : memref<16x128xf32, #tpu.memory_space<vmem>>, vector<16x128xf32>
    tpu.vector_store %arg6[%c0_10, %c0_11], %11 {strides = array<i32>} : memref<16x128xf32, #tpu.memory_space<vmem>>, vector<16x128xf32>,
    return
  }
  func.func @transform_0(%arg0: i32) -> (i32, i32) {
    %c0_i32 = arith.constant 0 : i32
    %c0_i32_0 = arith.constant 0 : i32
    return %arg0, %c0_i32 : i32, i32
  }
  func.func @transform_1(%arg0: i32) -> (i32, i32) {
    %c0_i32 = arith.constant 0 : i32
    %c0_i32_0 = arith.constant 0 : i32
    %c0_i32_1 = arith.constant 0 : i32
    return %c0_i32, %c0_i32_0 : i32, i32
  }
  func.func @transform_2(%arg0: i32) -> (i32, i32) {
    %c0_i32 = arith.constant 0 : i32
    %c0_i32_0 = arith.constant 0 : i32
    %c0_i32_1 = arith.constant 0 : i32
    return %c0_i32, %c0_i32_0 : i32, i32
  }
  func.func @transform_3(%arg0: i32) -> (i32, i32) {
    %c0_i32 = arith.constant 0 : i32
    %c0_i32_0 = arith.constant 0 : i32
    %c0_i32_1 = arith.constant 0 : i32
    return %c0_i32, %c0_i32_0 : i32, i32
  }
  func.func @transform_4(%arg0: i32) -> (i32, i32) {
    %c0_i32 = arith.constant 0 : i32
    %c0_i32_0 = arith.constant 0 : i32
    %c0_i32_1 = arith.constant 0 : i32
    return %c0_i32, %c0_i32_0 : i32, i32
  }
  func.func @transform_5(%arg0: i32) -> (i32, i32) {
    %c0_i32 = arith.constant 0 : i32
    %c0_i32_0 = arith.constant 0 : i32
    return %arg0, %c0_i32 : i32, i32
  }
}

</mosaic_0001>

<llo_original>
// kernel: tpu_custom_call.1
$region0: #{tpu_custom_call.1}
  #allocation0 [shape = 'u32[]', space=smem, size = 0x4, offset = 0x4, fixed_abs, tag = 'smem constant byte address 0x4 - core index']
  #allocation1 [shape = 'u32[144,128]{1,0:T(1,128)}', space=vmem, size = 0x12000, scoped, tag = 'internal scratch']
  %s0 = inlined_call_operand.vmem [shape: bf16[16,256], index: 0, kind: input, shape index: {}]
  %s1 = inlined_call_operand.vmem [shape: bf16[256,64], index: 1, kind: input, shape index: {}]
  %s2 = inlined_call_operand.vmem [shape: f32[1,64], index: 2, kind: input, shape index: {}]
  %s3 = inlined_call_operand.vmem [shape: f32[64,128], index: 3, kind: input, shape index: {}]
  %s4 = inlined_call_operand.vmem [shape: f32[1,128], index: 4, kind: input, shape index: {}]
  %s5 = inlined_call_operand.hbm [shape: f32[16,128], index: 5, kind: output, shape index: {}]
  %s6 = sld [smem:[#allocation0]]
  $region30: #{tpu_custom_call.1} parent=0
    _
  %s8 = ssub.s32 1, %s6
  %s9 = scalar_select 0, %s8, %s6
  $region1: #{tpu_custom_call.1} parent=0
    #allocation2 [shape = 'u8[8192]{0}', space=vmem, size = 0x2000, scoped, tag = 'output window, operand 0, single buffered']
    #allocation3 [shape = 's32[1]{0}', space=sflag, size = 0x4, scoped, tag = 'scoped memory for tpu_custom_call.1']
    %10 = vsyncpa [#allocation3], 0
    // Predicated region
    $region2: #{tpu_custom_call.1} parent=1 // pred_check
      _
    $region3: #{tpu_custom_call.1} parent=1 // pred_check_branch
      %12 = sbr.rel (0) target = $region5
    $region4: #{tpu_custom_call.1} parent=1 // pred_region
      _
    $region5: #{tpu_custom_call.1} parent=1 // pred_fallthru
      _
    // Predicated region
    $region6: #{tpu_custom_call.1} parent=1 // pred_check
      _
    $region7: #{tpu_custom_call.1} parent=1 // pred_check_branch
      %14 = sbr.rel (0) target = $region9
    $region8: #{tpu_custom_call.1} parent=1 // pred_region
      _
    $region9: #{tpu_custom_call.1} parent=1 // pred_fallthru
      _
    // Predicated region
    $region10: #{tpu_custom_call.1} parent=1 // pred_check
      _
    $region11: #{tpu_custom_call.1} parent=1 // pred_check_branch
      %16 = sbr.rel (0) target = $region13
    $region12: #{tpu_custom_call.1} parent=1 // pred_region
      _
    $region13: #{tpu_custom_call.1} parent=1 // pred_fallthru
      _
    // Predicated region
    $region14: #{tpu_custom_call.1} parent=1 // pred_check
      _
    $region15: #{tpu_custom_call.1} parent=1 // pred_check_branch
      %18 = sbr.rel (0) target = $region17
    $region16: #{tpu_custom_call.1} parent=1 // pred_region
      _
    $region17: #{tpu_custom_call.1} parent=1 // pred_fallthru
      _
    // Predicated region
    $region18: #{tpu_custom_call.1} parent=1 // pred_check
      _
    $region19: #{tpu_custom_call.1} parent=1 // pred_check_branch
      %20 = sbr.rel (0) target = $region21
    $region20: #{tpu_custom_call.1} parent=1 // pred_region
      _
    $region21: #{tpu_custom_call.1} parent=1 // pred_fallthru
      _
    %v22 = vld [vmem:[%s0] sm:$0xff]
    %v23 = vld [vmem:[%s0 + $0x8] sm:$0xff]
    %v24 = vld [vmem:[%s1] sm:$0xf]
    %v25 = vld [vmem:[%s1 + $0x4] sm:$0xf]
    %v26 = vld [vmem:[%s1 + $0x8] sm:$0xf]
    %v27 = vld [vmem:[%s1 + $0xc] sm:$0xf]
    %v28 = vld [vmem:[%s1 + $0x10] sm:$0xf]
    %v29 = vld [vmem:[%s1 + $0x14] sm:$0xf]
    %v30 = vld [vmem:[%s1 + $0x18] sm:$0xf]
    %v31 = vld [vmem:[%s1 + $0x1c] sm:$0xf]
    %v32 = vld [vmem:[%s1 + $0x20] sm:$0xf]
    %v33 = vld [vmem:[%s1 + $0x24] sm:$0xf]
    %v34 = vld [vmem:[%s1 + $0x28] sm:$0xf]
    %v35 = vld [vmem:[%s1 + $0x2c] sm:$0xf]
    %v36 = vld [vmem:[%s1 + $0x30] sm:$0xf]
    %v37 = vld [vmem:[%s1 + $0x34] sm:$0xf]
    %v38 = vld [vmem:[%s1 + $0x38] sm:$0xf]
    %v39 = vld [vmem:[%s1 + $0x3c] sm:$0xf]
    %v40 = vld [vmem:[%s1 + $0x40] sm:$0xf]
    %v41 = vld [vmem:[%s1 + $0x44] sm:$0xf]
    %v42 = vld [vmem:[%s1 + $0x48] sm:$0xf]
    %v43 = vld [vmem:[%s1 + $0x4c] sm:$0xf]
    %v44 = vld [vmem:[%s1 + $0x50] sm:$0xf]
    %v45 = vld [vmem:[%s1 + $0x54] sm:$0xf]
    %v46 = vld [vmem:[%s1 + $0x58] sm:$0xf]
    %v47 = vld [vmem:[%s1 + $0x5c] sm:$0xf]
    %v48 = vld [vmem:[%s1 + $0x60] sm:$0xf]
    %v49 = vld [vmem:[%s1 + $0x64] sm:$0xf]
    %v50 = vld [vmem:[%s1 + $0x68] sm:$0xf]
    %v51 = vld [vmem:[%s1 + $0x6c] sm:$0xf]
    %v52 = vld [vmem:[%s1 + $0x70] sm:$0xf]
    %v53 = vld [vmem:[%s1 + $0x74] sm:$0xf]
    %v54 = vld [vmem:[%s1 + $0x78] sm:$0xf]
    %v55 = vld [vmem:[%s1 + $0x7c] sm:$0xf]
    %v56 = vld [vmem:[%s2] sm:$0x1]
    %v58 = vlaneseq
    %v59 = vshrl.u32 %v58, 7
    %v60 = vsub.s32 0, %v59
    %v61 = vrot.slane %v56, %v60
    %v65 = vunpack.c.l.b16 %v22
    %v66 = vunpack.c.h.b16 %v22
    %v67 = vunpack.c.l.b16 %v23
    %v68 = vunpack.c.h.b16 %v23
    %v69 = vpack.c.b16 %v67, %v65
    %v70 = vpack.c.b16 %v68, %v66
    %v105 = vunpack.c.l.b16 %v24
    %v106 = vunpack.c.l.b16 %v25
    %v107 = vunpack.c.l.b16 %v26
    %v108 = vunpack.c.l.b16 %v27
    %v109 = vunpack.c.l.b16 %v28
    %v110 = vunpack.c.l.b16 %v29
    %v111 = vunpack.c.l.b16 %v30
    %v112 = vunpack.c.l.b16 %v31
    %v113 = vunpack.c.l.b16 %v32
    %v114 = vunpack.c.l.b16 %v33
    %v115 = vunpack.c.l.b16 %v34
    %v116 = vunpack.c.l.b16 %v35
    %v117 = vunpack.c.l.b16 %v36
    %v118 = vunpack.c.l.b16 %v37
    %v119 = vunpack.c.l.b16 %v38
    %v120 = vunpack.c.l.b16 %v39
    %v121 = vunpack.c.l.b16 %v40
    %v122 = vunpack.c.l.b16 %v41
    %v123 = vunpack.c.l.b16 %v42
    %v124 = vunpack.c.l.b16 %v43
    %v125 = vunpack.c.l.b16 %v44
    %v126 = vunpack.c.l.b16 %v45
    %v127 = vunpack.c.l.b16 %v46
    %v128 = vunpack.c.l.b16 %v47
    %v129 = vunpack.c.l.b16 %v48
    %v130 = vunpack.c.l.b16 %v49
    %v131 = vunpack.c.l.b16 %v50
    %v132 = vunpack.c.l.b16 %v51
    %v133 = vunpack.c.l.b16 %v52
    %v134 = vunpack.c.l.b16 %v53
    %v135 = vunpack.c.l.b16 %v54
    %v136 = vunpack.c.l.b16 %v55
    %v137 = vpack.c.b16 %v106, %v105
    %v138 = vpack.c.b16 %v108, %v107
    %v139 = vpack.c.b16 %v110, %v109
    %v140 = vpack.c.b16 %v112, %v111
    %v141 = vpack.c.b16 %v114, %v113
    %v142 = vpack.c.b16 %v116, %v115
    %v143 = vpack.c.b16 %v118, %v117
    %v144 = vpack.c.b16 %v120, %v119
    %v145 = vpack.c.b16 %v122, %v121
    %v146 = vpack.c.b16 %v124, %v123
    %v147 = vpack.c.b16 %v126, %v125
    %v148 = vpack.c.b16 %v128, %v127
    %v149 = vpack.c.b16 %v130, %v129
    %v150 = vpack.c.b16 %v132, %v131
    %v151 = vpack.c.b16 %v134, %v133
    %v152 = vpack.c.b16 %v136, %v135
    %169 = vmatprep.subr.bf16.mxu0 0
    %170 = vmatpush1.bf16.msra.mxu0 %v144
    %171 = vmatprep.subr.bf16.mxu0 0
    %172 = vmatpush1.bf16.msra.mxu0 %v143
    %173 = vmatprep.subr.bf16.mxu0 0
    %174 = vmatpush1.bf16.msra.mxu0 %v142
    %175 = vmatprep.subr.bf16.mxu0 0
    %176 = vmatpush1.bf16.msra.mxu0 %v141
    %177 = vmatprep.subr.bf16.mxu0 0
    %178 = vmatpush1.bf16.msra.mxu0 %v140
    %179 = vmatprep.subr.bf16.mxu0 0
    %180 = vmatpush1.bf16.msra.mxu0 %v139
    %181 = vmatprep.subr.bf16.mxu0 0
    %182 = vmatpush1.bf16.msra.mxu0 %v138
    %183 = vmatprep.subr.bf16.mxu0 0
    %184 = vmatpush1.bf16.msra.mxu0 %v137
    %185 = vmatprep.subr.bf16.mxu0 0
    %186 = vmatpush2.bf16.msra.mxu0 %v152
    %187 = vmatprep.subr.bf16.mxu0 0
    %188 = vmatpush2.bf16.msra.mxu0 %v151
    %189 = vmatprep.subr.bf16.mxu0 0
    %190 = vmatpush2.bf16.msra.mxu0 %v150
    %191 = vmatprep.subr.bf16.mxu0 0
    %192 = vmatpush2.bf16.msra.mxu0 %v149
    %193 = vmatprep.subr.bf16.mxu0 0
    %194 = vmatpush2.bf16.msra.mxu0 %v148
    %195 = vmatprep.subr.bf16.mxu0 0
    %196 = vmatpush2.bf16.msra.mxu0 %v147
    %197 = vmatprep.subr.bf16.mxu0 0
    %198 = vmatpush2.bf16.msra.mxu0 %v146
    %199 = vmatprep.subr.bf16.mxu0 0
    %200 = vmatpush2.bf16.msra.mxu0 %v145
    %201 = vmatprep.mubr.bf16.mxu0 %v70
    %202 = vmatmul.mubr.bf16.gmra.mxu0 %v69
    %v203 = vpop.f32.mrf.mxu0
    %v204 = vadd.f32 %v61, %v203
    %v205 = vpop.f32.mrf.mxu0
    %v206 = vpop.f32.mrf.mxu0
    %v207 = vadd.f32 %v61, %v206
    %v208 = vpop.f32.mrf.mxu0
    %209 = vdwg.mxu0
    %v210 = vtanh.pop %v204
    %v211 = vtanh.pop %v207
    %v212 = vld [vmem:[%s3] sm:$0xff]
    %v213 = vld [vmem:[%s3 + $0x8] sm:$0xff]
    %v214 = vld [vmem:[%s3 + $0x10] sm:$0xff]
    %v215 = vld [vmem:[%s3 + $0x18] sm:$0xff]
    %v216 = vld [vmem:[%s3 + $0x20] sm:$0xff]
    %v217 = vld [vmem:[%s3 + $0x28] sm:$0xff]
    %v218 = vld [vmem:[%s3 + $0x30] sm:$0xff]
    %v219 = vld [vmem:[%s3 + $0x38] sm:$0xff]
    %v220 = vld [vmem:[%s4] sm:$0x1]
    %v222 = vlaneseq
    %v223 = vshrl.u32 %v222, 7
    %v224 = vsub.s32 0, %v223
    %v225 = vrot.slane %v220, %v224
    %vm227 = vcmask 523264
    %v229 = vsel %vm227, %v210, 0
    %v232 = vsel %vm227, %v211, 0
    %234 = vmatprep.subr.mxu0 0.0
    %235 = vmatpush1.msra.mxu0 0.0
    %236 = vmatprep.subr.mxu0 0.0
    %237 = vmatpush1.msra.mxu0 0.0
    %238 = vmatprep.subr.mxu0 0.0
    %239 = vmatpush1.msra.mxu0 0.0
    %240 = vmatprep.subr.mxu0 0.0
    %241 = vmatpush1.msra.mxu0 0.0
    %242 = vmatprep.subr.mxu0 0.0
    %243 = vmatpush1.msra.mxu0 0.0
    %244 = vmatprep.subr.mxu0 0.0
    %245 = vmatpush1.msra.mxu0 0.0
    %246 = vmatprep.subr.mxu0 0.0
    %247 = vmatpush1.msra.mxu0 0.0
    %248 = vmatprep.subr.mxu0 0.0
    %249 = vmatpush1.msra.mxu0 0.0
    %250 = vmatprep.subr.mxu0 0.0
    %251 = vmatpush1.msra.mxu0 %v219
    %252 = vmatprep.subr.mxu0 0.0
    %253 = vmatpush1.msra.mxu0 %v218
    %254 = vmatprep.subr.mxu0 0.0
    %255 = vmatpush1.msra.mxu0 %v217
    %256 = vmatprep.subr.mxu0 0.0
    %257 = vmatpush1.msra.mxu0 %v216
    %258 = vmatprep.subr.mxu0 0.0
    %259 = vmatpush1.msra.mxu0 %v215
    %260 = vmatprep.subr.mxu0 0.0
    %261 = vmatpush1.msra.mxu0 %v214
    %262 = vmatprep.subr.mxu0 0.0
    %263 = vmatpush1.msra.mxu0 %v213
    %264 = vmatprep.subr.mxu0 0.0
    %265 = vmatpush1.msra.mxu0 %v212
    %266 = vmatprep.subr.mxu0 0.0
    %267 = vmatpush2.msra.mxu0 0.0
    %268 = vmatprep.subr.mxu0 0.0
    %269 = vmatpush2.msra.mxu0 0.0
    %270 = vmatprep.subr.mxu0 0.0
    %271 = vmatpush2.msra.mxu0 0.0
    %272 = vmatprep.subr.mxu0 0.0
    %273 = vmatpush2.msra.mxu0 0.0
    %274 = vmatprep.subr.mxu0 0.0
    %275 = vmatpush2.msra.mxu0 0.0
    %276 = vmatprep.subr.mxu0 0.0
    %277 = vmatpush2.msra.mxu0 0.0
    %278 = vmatprep.subr.mxu0 0.0
    %279 = vmatpush2.msra.mxu0 0.0
    %280 = vmatprep.subr.mxu0 0.0
    %281 = vmatpush2.msra.mxu0 0.0
    %282 = vmatprep.subr.mxu0 0.0
    %283 = vmatpush2.msra.mxu0 0.0
    %284 = vmatprep.subr.mxu0 0.0
    %285 = vmatpush2.msra.mxu0 0.0
    %286 = vmatprep.subr.mxu0 0.0
    %287 = vmatpush2.msra.mxu0 0.0
    %288 = vmatprep.subr.mxu0 0.0
    %289 = vmatpush2.msra.mxu0 0.0
    %290 = vmatprep.subr.mxu0 0.0
    %291 = vmatpush2.msra.mxu0 0.0
    %292 = vmatprep.subr.mxu0 0.0
    %293 = vmatpush2.msra.mxu0 0.0
    %294 = vmatprep.subr.mxu0 0.0
    %295 = vmatpush2.msra.mxu0 0.0
    %296 = vmatprep.subr.mxu0 0.0
    %297 = vmatpush2.msra.mxu0 0.0
    %298 = vmatprep.mubr.f32.mxu0 0.0
    %299 = vmatmul.mubr.f32.gmra.mxu0 %v229
    %v300 = vpop.f32.mrf.mxu0
    %v301 = vadd.f32 %v225, %v300
    %v302 = vpop.f32.mrf.mxu0
    %303 = vmatprep.mubr.f32.mxu0 0.0
    %304 = vmatmul.mubr.f32.gmra.mxu0 %v232
    %v305 = vpop.f32.mrf.mxu0
    %v306 = vadd.f32 %v225, %v305
    %v307 = vpop.f32.mrf.mxu0
    %308 = vdwg.mxu0
    %309 = vst [vmem:[#allocation2] sm:$0xff] %v301
    %310 = vst [vmem:[#allocation2 + $0x8] sm:$0xff] %v306
    // Predicated region
    $region22: #{tpu_custom_call.1} parent=1 // pred_check
      _
    $region23: #{tpu_custom_call.1} parent=1 // pred_check_branch
      %312 = sbr.rel (0) target = $region25
    $region24: #{tpu_custom_call.1} parent=1 // pred_region
      %s314 = ssub.s32 256, 256
      %315 = vsyncadd [#allocation3], %s314
      %s316 = sshll.u32 [#allocation2], 4
      %s317 = int_to_ptr.vmem [resolvable:$true] %s316
      %322 = dma.vmem_to_hbm [thread:$0]  %s317, 256, %s5, [#allocation3], 128, 128, 8
    $region25: #{tpu_custom_call.1} parent=1 // pred_fallthru
      _
    // Predicated region
    $region26: #{tpu_custom_call.1} parent=1 // pred_check
      _
    $region27: #{tpu_custom_call.1} parent=1 // pred_check_branch
      %324 = sbr.rel (0) target = $region29
    $region28: #{tpu_custom_call.1} parent=1 // pred_region
      %325 = dma.done [#allocation3], 256
    $region29: #{tpu_custom_call.1} parent=1 // pred_fallthru
      _
    %326 = vsyncpa [#allocation3], 1

// kernel: tpu_custom_call.1
$region0: #{tpu_custom_call.1}
  #allocation0 [shape = 'u32[]', space=smem, size = 0x4, offset = 0x4, fixed_abs, tag = 'smem constant byte address 0x4 - core index']
  #allocation1 [shape = 'u32[144,128]{1,0:T(1,128)}', space=vmem, size = 0x12000, scoped, tag = 'internal scratch']
  %s0 = inlined_call_operand.vmem [shape: bf16[16,256], index: 0, kind: input, shape index: {}]
  %s1 = inlined_call_operand.vmem [shape: bf16[256,64], index: 1, kind: input, shape index: {}]
  %s2 = inlined_call_operand.vmem [shape: f32[1,64], index: 2, kind: input, shape index: {}]
  %s3 = inlined_call_operand.vmem [shape: f32[64,128], index: 3, kind: input, shape index: {}]
  %s4 = inlined_call_operand.vmem [shape: f32[1,128], index: 4, kind: input, shape index: {}]
  %s5 = inlined_call_operand.hbm [shape: f32[16,128], index: 5, kind: output, shape index: {}]
  %s6 = sld [smem:[#allocation0]]
  $region30: #{tpu_custom_call.1} parent=0
    _
  %s8 = ssub.s32 1, %s6
  %s9 = scalar_select 0, %s8, %s6
  $region1: #{tpu_custom_call.1} parent=0
    #allocation2 [shape = 'u8[8192]{0}', space=vmem, size = 0x2000, scoped, tag = 'output window, operand 0, single buffered']
    #allocation3 [shape = 's32[1]{0}', space=sflag, size = 0x4, scoped, tag = 'scoped memory for tpu_custom_call.1']
    %10 = vsyncpa [#allocation3], 0
    // Predicated region
    $region2: #{tpu_custom_call.1} parent=1 // pred_check
      _
    $region3: #{tpu_custom_call.1} parent=1 // pred_check_branch
      %12 = sbr.rel (0) target = $region5
    $region4: #{tpu_custom_call.1} parent=1 // pred_region
      _
    $region5: #{tpu_custom_call.1} parent=1 // pred_fallthru
      _
    // Predicated region
    $region6: #{tpu_custom_call.1} parent=1 // pred_check
      _
    $region7: #{tpu_custom_call.1} parent=1 // pred_check_branch
      %14 = sbr.rel (0) target = $region9
    $region8: #{tpu_custom_call.1} parent=1 // pred_region
      _
    $region9: #{tpu_custom_call.1} parent=1 // pred_fallthru
      _
    // Predicated region
    $region10: #{tpu_custom_call.1} parent=1 // pred_check
      _
    $region11: #{tpu_custom_call.1} parent=1 // pred_check_branch
      %16 = sbr.rel (0) target = $region13
    $region12: #{tpu_custom_call.1} parent=1 // pred_region
      _
    $region13: #{tpu_custom_call.1} parent=1 // pred_fallthru
      _
    // Predicated region
    $region14: #{tpu_custom_call.1} parent=1 // pred_check
      _
    $region15: #{tpu_custom_call.1} parent=1 // pred_check_branch
      %18 = sbr.rel (0) target = $region17
    $region16: #{tpu_custom_call.1} parent=1 // pred_region
      _
    $region17: #{tpu_custom_call.1} parent=1 // pred_fallthru
      _
    // Predicated region
    $region18: #{tpu_custom_call.1} parent=1 // pred_check
      _
    $region19: #{tpu_custom_call.1} parent=1 // pred_check_branch
      %20 = sbr.rel (0) target = $region21
    $region20: #{tpu_custom_call.1} parent=1 // pred_region
      _
    $region21: #{tpu_custom_call.1} parent=1 // pred_fallthru
      _
    %v22 = vld [vmem:[%s0] sm:$0xff]
    %v23 = vld [vmem:[%s0 + $0x8] sm:$0xff]
    %v24 = vld [vmem:[%s1] sm:$0xf]
    %v25 = vld [vmem:[%s1 + $0x4] sm:$0xf]
    %v26 = vld [vmem:[%s1 + $0x8] sm:$0xf]
    %v27 = vld [vmem:[%s1 + $0xc] sm:$0xf]
    %v28 = vld [vmem:[%s1 + $0x10] sm:$0xf]
    %v29 = vld [vmem:[%s1 + $0x14] sm:$0xf]
    %v30 = vld [vmem:[%s1 + $0x18] sm:$0xf]
    %v31 = vld [vmem:[%s1 + $0x1c] sm:$0xf]
    %v32 = vld [vmem:[%s1 + $0x20] sm:$0xf]
    %v33 = vld [vmem:[%s1 + $0x24] sm:$0xf]
    %v34 = vld [vmem:[%s1 + $0x28] sm:$0xf]
    %v35 = vld [vmem:[%s1 + $0x2c] sm:$0xf]
    %v36 = vld [vmem:[%s1 + $0x30] sm:$0xf]
    %v37 = vld [vmem:[%s1 + $0x34] sm:$0xf]
    %v38 = vld [vmem:[%s1 + $0x38] sm:$0xf]
    %v39 = vld [vmem:[%s1 + $0x3c] sm:$0xf]
    %v40 = vld [vmem:[%s1 + $0x40] sm:$0xf]
    %v41 = vld [vmem:[%s1 + $0x44] sm:$0xf]
    %v42 = vld [vmem:[%s1 + $0x48] sm:$0xf]
    %v43 = vld [vmem:[%s1 + $0x4c] sm:$0xf]
    %v44 = vld [vmem:[%s1 + $0x50] sm:$0xf]
    %v45 = vld [vmem:[%s1 + $0x54] sm:$0xf]
    %v46 = vld [vmem:[%s1 + $0x58] sm:$0xf]
    %v47 = vld [vmem:[%s1 + $0x5c] sm:$0xf]
    %v48 = vld [vmem:[%s1 + $0x60] sm:$0xf]
    %v49 = vld [vmem:[%s1 + $0x64] sm:$0xf]
    %v50 = vld [vmem:[%s1 + $0x68] sm:$0xf]
    %v51 = vld [vmem:[%s1 + $0x6c] sm:$0xf]
    %v52 = vld [vmem:[%s1 + $0x70] sm:$0xf]
    %v53 = vld [vmem:[%s1 + $0x74] sm:$0xf]
    %v54 = vld [vmem:[%s1 + $0x78] sm:$0xf]
    %v55 = vld [vmem:[%s1 + $0x7c] sm:$0xf]
    %v56 = vld [vmem:[%s2] sm:$0x1]
    %v58 = vlaneseq
    %v59 = vshrl.u32 %v58, 7
    %v60 = vsub.s32 0, %v59
    %v61 = vrot.slane %v56, %v60
    %v65 = vunpack.c.l.b16 %v22
    %v66 = vunpack.c.h.b16 %v22
    %v67 = vunpack.c.l.b16 %v23
    %v68 = vunpack.c.h.b16 %v23
    %v69 = vpack.c.b16 %v67, %v65
    %v70 = vpack.c.b16 %v68, %v66
    %v105 = vunpack.c.l.b16 %v24
    %v106 = vunpack.c.l.b16 %v25
    %v107 = vunpack.c.l.b16 %v26
    %v108 = vunpack.c.l.b16 %v27
    %v109 = vunpack.c.l.b16 %v28
    %v110 = vunpack.c.l.b16 %v29
    %v111 = vunpack.c.l.b16 %v30
    %v112 = vunpack.c.l.b16 %v31
    %v113 = vunpack.c.l.b16 %v32
    %v114 = vunpack.c.l.b16 %v33
    %v115 = vunpack.c.l.b16 %v34
    %v116 = vunpack.c.l.b16 %v35
    %v117 = vunpack.c.l.b16 %v36
    %v118 = vunpack.c.l.b16 %v37
    %v119 = vunpack.c.l.b16 %v38
    %v120 = vunpack.c.l.b16 %v39
    %v121 = vunpack.c.l.b16 %v40
    %v122 = vunpack.c.l.b16 %v41
    %v123 = vunpack.c.l.b16 %v42
    %v124 = vunpack.c.l.b16 %v43
    %v125 = vunpack.c.l.b16 %v44
    %v126 = vunpack.c.l.b16 %v45
    %v127 = vunpack.c.l.b16 %v46
    %v128 = vunpack.c.l.b16 %v47
    %v129 = vunpack.c.l.b16 %v48
    %v130 = vunpack.c.l.b16 %v49
    %v131 = vunpack.c.l.b16 %v50
    %v132 = vunpack.c.l.b16 %v51
    %v133 = vunpack.c.l.b16 %v52
    %v134 = vunpack.c.l.b16 %v53
    %v135 = vunpack.c.l.b16 %v54
    %v136 = vunpack.c.l.b16 %v55
    %v137 = vpack.c.b16 %v106, %v105
    %v138 = vpack.c.b16 %v108, %v107
    %v139 = vpack.c.b16 %v110, %v109
    %v140 = vpack.c.b16 %v112, %v111
    %v141 = vpack.c.b16 %v114, %v113
    %v142 = vpack.c.b16 %v116, %v115
    %v143 = vpack.c.b16 %v118, %v117
    %v144 = vpack.c.b16 %v120, %v119
    %v145 = vpack.c.b16 %v122, %v121
    %v146 = vpack.c.b16 %v124, %v123
    %v147 = vpack.c.b16 %v126, %v125
    %v148 = vpack.c.b16 %v128, %v127
    %v149 = vpack.c.b16 %v130, %v129
    %v150 = vpack.c.b16 %v132, %v131
    %v151 = vpack.c.b16 %v134, %v133
    %v152 = vpack.c.b16 %v136, %v135
    %169 = vmatprep.subr.bf16.mxu0 0
    %170 = vmatpush1.bf16.msra.mxu0 %v144
    %171 = vmatprep.subr.bf16.mxu0 0
    %172 = vmatpush1.bf16.msra.mxu0 %v143
    %173 = vmatprep.subr.bf16.mxu0 0
    %174 = vmatpush1.bf16.msra.mxu0 %v142
    %175 = vmatprep.subr.bf16.mxu0 0
    %176 = vmatpush1.bf16.msra.mxu0 %v141
    %177 = vmatprep.subr.bf16.mxu0 0
    %178 = vmatpush1.bf16.msra.mxu0 %v140
    %179 = vmatprep.subr.bf16.mxu0 0
    %180 = vmatpush1.bf16.msra.mxu0 %v139
    %181 = vmatprep.subr.bf16.mxu0 0
    %182 = vmatpush1.bf16.msra.mxu0 %v138
    %183 = vmatprep.subr.bf16.mxu0 0
    %184 = vmatpush1.bf16.msra.mxu0 %v137
    %185 = vmatprep.subr.bf16.mxu0 0
    %186 = vmatpush2.bf16.msra.mxu0 %v152
    %187 = vmatprep.subr.bf16.mxu0 0
    %188 = vmatpush2.bf16.msra.mxu0 %v151
    %189 = vmatprep.subr.bf16.mxu0 0
    %190 = vmatpush2.bf16.msra.mxu0 %v150
    %191 = vmatprep.subr.bf16.mxu0 0
    %192 = vmatpush2.bf16.msra.mxu0 %v149
    %193 = vmatprep.subr.bf16.mxu0 0
    %194 = vmatpush2.bf16.msra.mxu0 %v148
    %195 = vmatprep.subr.bf16.mxu0 0
    %196 = vmatpush2.bf16.msra.mxu0 %v147
    %197 = vmatprep.subr.bf16.mxu0 0
    %198 = vmatpush2.bf16.msra.mxu0 %v146
    %199 = vmatprep.subr.bf16.mxu0 0
    %200 = vmatpush2.bf16.msra.mxu0 %v145
    %201 = vmatprep.mubr.bf16.mxu0 %v70
    %202 = vmatmul.mubr.bf16.gmra.mxu0 %v69
    %v203 = vpop.f32.mrf.mxu0
    %v204 = vadd.f32 %v61, %v203
    %v205 = vpop.f32.mrf.mxu0
    %v206 = vpop.f32.mrf.mxu0
    %v207 = vadd.f32 %v61, %v206
    %v208 = vpop.f32.mrf.mxu0
    %209 = vdwg.mxu0
    %v210 = vtanh.pop %v204
    %v211 = vtanh.pop %v207
    %v212 = vld [vmem:[%s3] sm:$0xff]
    %v213 = vld [vmem:[%s3 + $0x8] sm:$0xff]
    %v214 = vld [vmem:[%s3 + $0x10] sm:$0xff]
    %v215 = vld [vmem:[%s3 + $0x18] sm:$0xff]
    %v216 = vld [vmem:[%s3 + $0x20] sm:$0xff]
    %v217 = vld [vmem:[%s3 + $0x28] sm:$0xff]
    %v218 = vld [vmem:[%s3 + $0x30] sm:$0xff]
    %v219 = vld [vmem:[%s3 + $0x38] sm:$0xff]
    %v220 = vld [vmem:[%s4] sm:$0x1]
    %v222 = vlaneseq
    %v223 = vshrl.u32 %v222, 7
    %v224 = vsub.s32 0, %v223
    %v225 = vrot.slane %v220, %v224
    %vm227 = vcmask 523264
    %v229 = vsel %vm227, %v210, 0
    %v232 = vsel %vm227, %v211, 0
    %234 = vmatprep.subr.mxu0 0.0
    %235 = vmatpush1.msra.mxu0 0.0
    %236 = vmatprep.subr.mxu0 0.0
    %237 = vmatpush1.msra.mxu0 0.0
    %238 = vmatprep.subr.mxu0 0.0
    %239 = vmatpush1.msra.mxu0 0.0
    %240 = vmatprep.subr.mxu0 0.0
    %241 = vmatpush1.msra.mxu0 0.0
    %242 = vmatprep.subr.mxu0 0.0
    %243 = vmatpush1.msra.mxu0 0.0
    %244 = vmatprep.subr.mxu0 0.0
    %245 = vmatpush1.msra.mxu0 0.0
    %246 = vmatprep.subr.mxu0 0.0
    %247 = vmatpush1.msra.mxu0 0.0
    %248 = vmatprep.subr.mxu0 0.0
    %249 = vmatpush1.msra.mxu0 0.0
    %250 = vmatprep.subr.mxu0 0.0
    %251 = vmatpush1.msra.mxu0 %v219
    %252 = vmatprep.subr.mxu0 0.0
    %253 = vmatpush1.msra.mxu0 %v218
    %254 = vmatprep.subr.mxu0 0.0
    %255 = vmatpush1.msra.mxu0 %v217
    %256 = vmatprep.subr.mxu0 0.0
    %257 = vmatpush1.msra.mxu0 %v216
    %258 = vmatprep.subr.mxu0 0.0
    %259 = vmatpush1.msra.mxu0 %v215
    %260 = vmatprep.subr.mxu0 0.0
    %261 = vmatpush1.msra.mxu0 %v214
    %262 = vmatprep.subr.mxu0 0.0
    %263 = vmatpush1.msra.mxu0 %v213
    %264 = vmatprep.subr.mxu0 0.0
    %265 = vmatpush1.msra.mxu0 %v212
    %266 = vmatprep.subr.mxu0 0.0
    %267 = vmatpush2.msra.mxu0 0.0
    %268 = vmatprep.subr.mxu0 0.0
    %269 = vmatpush2.msra.mxu0 0.0
    %270 = vmatprep.subr.mxu0 0.0
    %271 = vmatpush2.msra.mxu0 0.0
    %272 = vmatprep.subr.mxu0 0.0
    %273 = vmatpush2.msra.mxu0 0.0
    %274 = vmatprep.subr.mxu0 0.0
    %275 = vmatpush2.msra.mxu0 0.0
    %276 = vmatprep.subr.mxu0 0.0
    %277 = vmatpush2.msra.mxu0 0.0
    %278 = vmatprep.subr.mxu0 0.0
    %279 = vmatpush2.msra.mxu0 0.0
    %280 = vmatprep.subr.mxu0 0.0
    %281 = vmatpush2.msra.mxu0 0.0
    %282 = vmatprep.subr.mxu0 0.0
    %283 = vmatpush2.msra.mxu0 0.0
    %284 = vmatprep.subr.mxu0 0.0
    %285 = vmatpush2.msra.mxu0 0.0
    %286 = vmatprep.subr.mxu0 0.0
    %287 = vmatpush2.msra.mxu0 0.0
    %288 = vmatprep.subr.mxu0 0.0
    %289 = vmatpush2.msra.mxu0 0.0
    %290 = vmatprep.subr.mxu0 0.0
    %291 = vmatpush2.msra.mxu0 0.0
    %292 = vmatprep.subr.mxu0 0.0
    %293 = vmatpush2.msra.mxu0 0.0
    %294 = vmatprep.subr.mxu0 0.0
    %295 = vmatpush2.msra.mxu0 0.0
    %296 = vmatprep.subr.mxu0 0.0
    %297 = vmatpush2.msra.mxu0 0.0
    %298 = vmatprep.mubr.f32.mxu0 0.0
    %299 = vmatmul.mubr.f32.gmra.mxu0 %v229
    %v300 = vpop.f32.mrf.mxu0
    %v301 = vadd.f32 %v225, %v300
    %v302 = vpop.f32.mrf.mxu0
    %303 = vmatprep.mubr.f32.mxu0 0.0
    %304 = vmatmul.mubr.f32.gmra.mxu0 %v232
    %v305 = vpop.f32.mrf.mxu0
    %v306 = vadd.f32 %v225, %v305
    %v307 = vpop.f32.mrf.mxu0
    %308 = vdwg.mxu0
    %309 = vst [vmem:[#allocation2] sm:$0xff] %v301
    %310 = vst [vmem:[#allocation2 + $0x8] sm:$0xff] %v306
    // Predicated region
    $region22: #{tpu_custom_call.1} parent=1 // pred_check
      _
    $region23: #{tpu_custom_call.1} parent=1 // pred_check_branch
      %312 = sbr.rel (0) target = $region25
    $region24: #{tpu_custom_call.1} parent=1 // pred_region
      %s314 = ssub.s32 256, 256
      %315 = vsyncadd [#allocation3], %s314
      %s316 = sshll.u32 [#allocation2], 4
      %s317 = int_to_ptr.vmem [resolvable:$true] %s316
      %322 = dma.vmem_to_hbm [thread:$0]  %s317, 256, %s5, [#allocation3], 128, 128, 8
    $region25: #{tpu_custom_call.1} parent=1 // pred_fallthru
      _
    // Predicated region
    $region26: #{tpu_custom_call.1} parent=1 // pred_check
      _
    $region27: #{tpu_custom_call.1} parent=1 // pred_check_branch
      %324 = sbr.rel (0) target = $region29
    $region28: #{tpu_custom_call.1} parent=1 // pred_region
      %325 = dma.done [#allocation3], 256
    $region29: #{tpu_custom_call.1} parent=1 // pred_fallthru
      _
    %326 = vsyncpa [#allocation3], 1

</llo_original>
